<compile_context>
chip_gen: v6e
topology: v6e:2x2x1
jax: 0.10.0
libtpu: 0.0.40
codegen_flags: <defaults>
</compile_context>

<pallas_src>
import jax
import jax.numpy as jnp
from jax.experimental import pallas as pl
from jax.experimental.pallas import tpu as pltpu


def _se_kernel(x_ref, w1t_ref, b1_ref, w2_ref, b2_ref, o_ref):
    # x_ref : (1, C, HW)   current batch element
    # w1t   : (C, mid)     conv1.weight transposed   (conv1: C -> mid)
    # b1    : (1, mid)
    # w2    : (C, mid)     conv2.weight (conv2: mid -> C), row = output channel
    # b2    : (C, 1)
    x = x_ref[0].astype(jnp.float32)                        # (C, HW)

    # AdaptiveAvgPool2d(1): global mean over spatial positions (lane axis).
    pooled = jnp.mean(x, axis=-1, keepdims=True)            # (C, 1)

    # conv1 (1x1, C -> mid) + ReLU:  h[m] = sum_c w1[m, c] * pooled[c] + b1[m]
    w1t = w1t_ref[...].astype(jnp.float32)                  # (C, mid)
    b1 = b1_ref[...].astype(jnp.float32)                    # (1, mid)
    h = jnp.sum(w1t * pooled, axis=0, keepdims=True) + b1   # (1, mid)
    h = jnp.maximum(h, 0.0)

    # conv2 (1x1, mid -> C) + Sigmoid: s[c] = sum_m w2[c, m] * h[m] + b2[c]
    w2 = w2_ref[...].astype(jnp.float32)                    # (C, mid)
    b2 = b2_ref[...].astype(jnp.float32)                    # (C, 1)
    s = jnp.sum(w2 * h, axis=1, keepdims=True) + b2         # (C, 1)
    gate = 1.0 / (1.0 + jnp.exp(-s))                        # (C, 1)

    # Channel-wise scale, gate broadcast over the spatial (lane) axis.
    o_ref[0] = (x * gate).astype(o_ref.dtype)


def se_forward(x, w1, b1, w2, b2):
    """Forward pass of SEModule.

    x : (N, C, H, W)           NCHW, same layout as the PyTorch module
    w1: (mid, C)   b1: (mid,)  parameters of conv1 (1x1, C -> mid)
    w2: (C, mid)   b2: (C,)    parameters of conv2 (1x1, mid -> C)
    """
    N, C, H, W = x.shape
    mid = w1.shape[0]
    HW = H * W

    x3 = x.reshape(N, C, HW)        # free reshape (row-major contiguous)
    w1t = jnp.transpose(w1)         # (C, mid); tiny, done once outside the kernel
    b1r = b1.reshape(1, mid)
    b2c = b2.reshape(C, 1)

    # TODO(synk): for very large C*H*W per batch element this single-block-per-batch
    # layout would need an extra channel/spatial tiling pass; fine at these sizes.
    out = pl.pallas_call(
        _se_kernel,
        out_shape=jax.ShapeDtypeStruct((N, C, HW), x.dtype),
        grid=(N,),
        in_specs=[
            pl.BlockSpec((1, C, HW), lambda n: (n, 0, 0)),
            pl.BlockSpec((C, mid), lambda n: (0, 0)),
            pl.BlockSpec((1, mid), lambda n: (0, 0)),
            pl.BlockSpec((C, mid), lambda n: (0, 0)),
            pl.BlockSpec((C, 1), lambda n: (0, 0)),
        ],
        out_specs=pl.BlockSpec((1, C, HW), lambda n: (n, 0, 0)),
        compiler_params=pltpu.CompilerParams(
            dimension_semantics=("parallel",)
        ),
    )(x3, w1t, b1r, w2, b2c)

    return out.reshape(N, C, H, W)


def _se_reference(x, w1, b1, w2, b2):
    pooled = jnp.mean(x, axis=(2, 3))                 # (N, C)
    h = jnp.maximum(pooled @ w1.T + b1, 0.0)          # (N, mid)
    s = h @ w2.T + b2                                 # (N, C)
    gate = jax.nn.sigmoid(s)                          # (N, C)
    return x * gate[:, :, None, None]


if __name__ == "__main__":
    key = jax.random.PRNGKey(0)
    kx, k1, k2, k3, k4 = jax.random.split(key, 5)

    N, C, H, W = 2, 4, 16, 16
    mid = max(C // 4, 8)   # SEModule.reduction = 4  ->  mid = 8

    x = jax.random.normal(kx, (N, C, H, W), dtype=jnp.float32)
    w1 = jax.random.normal(k1, (mid, C), dtype=jnp.float32) * 0.5
    b1 = jax.random.normal(k2, (mid,), dtype=jnp.float32) * 0.1
    w2 = jax.random.normal(k3, (C, mid), dtype=jnp.float32) * 0.5
    b2 = jax.random.normal(k4, (C,), dtype=jnp.float32) * 0.1

    y = jax.block_until_ready(se_forward(x, w1, b1, w2, b2))
    y_ref = _se_reference(x, w1, b1, w2, b2)

    assert y.shape == (N, C, H, W), y.shape
    assert y.dtype == x.dtype
    assert bool(jnp.allclose(y, y_ref, atol=1e-5, rtol=1e-5)), (
        float(jnp.max(jnp.abs(y - y_ref))))

    print("KERNEL_OK")
</pallas_src>

<mosaic_0001>
module attributes {stable_mosaic.version = 11 : i64} {
  func.func @_se_kernel(%arg0: i32, %arg1: memref<1x4x256xf32, #tpu.memory_space<vmem>>, %arg2: memref<4x8xf32, #tpu.memory_space<vmem>>, %arg3: memref<1x8xf32, #tpu.memory_space<vmem>>, %arg4: memref<4x8xf32, #tpu.memory_space<vmem>>, %arg5: memref<4x1xf32, #tpu.memory_space<vmem>>, %arg6: memref<1x4x256xf32, #tpu.memory_space<vmem>>) attributes {dimension_semantics = [#tpu.dimension_semantics<parallel>], iteration_bounds = array<i64: 2>, scalar_prefetch = 0 : i64, scratch_operands = 0 : i64, tpu.core_type = #tpu.core_type<tc>, window_params = [{transform_indices = @transform_0, window_bounds = array<i64: 1, 4, 256>}, {pipeline_mode = #tpu.pipeline_mode<synchronous>, transform_indices = @transform_1, window_bounds = array<i64: 4, 8>}, {pipeline_mode = #tpu.pipeline_mode<synchronous>, transform_indices = @transform_2, window_bounds = array<i64: 1, 8>}, {pipeline_mode = #tpu.pipeline_mode<synchronous>, transform_indices = @transform_3, window_bounds = array<i64: 4, 8>}, {pipeline_mode = #tpu.pipeline_mode<synchronous>, transform_indices = @transform_4, window_bounds = array<i64: 4, 1>}, {transform_indices = @transform_5, window_bounds = array<i64: 1, 4, 256>}]} {
    %c0 = arith.constant 0 : index
    %c0_0 = arith.constant 0 : index
    %c0_1 = arith.constant 0 : index
    %0 = vector.load %arg1[%c0, %c0_0, %c0_1] : memref<1x4x256xf32, #tpu.memory_space<vmem>>, vector<1x4x256xf32>
    %1 = vector.shape_cast %0 : vector<1x4x256xf32> to vector<4x256xf32>
    %cst = arith.constant dense<0.000000e+00> : vector<4xf32>
    %2 = vector.multi_reduction <add>, %1, %cst [1] : vector<4x256xf32> to vector<4xf32>
    %3 = vector.shape_cast %2 : vector<4xf32> to vector<4x1xf32>
    %cst_2 = arith.constant 2.560000e+02 : f32
    %4 = vector.broadcast %cst_2 : f32 to vector<4x1xf32>
    %5 = arith.divf %3, %4 : vector<4x1xf32>
    %c0_3 = arith.constant 0 : index
    %c0_4 = arith.constant 0 : index
    %6 = vector.load %arg2[%c0_3, %c0_4] : memref<4x8xf32, #tpu.memory_space<vmem>>, vector<4x8xf32>
    %c0_5 = arith.constant 0 : index
    %c0_6 = arith.constant 0 : index
    %7 = vector.load %arg3[%c0_5, %c0_6] : memref<1x8xf32, #tpu.memory_space<vmem>>, vector<1x8xf32>
    %8 = vector.broadcast %5 : vector<4x1xf32> to vector<4x8xf32>
    %9 = arith.mulf %6, %8 : vector<4x8xf32>
    %cst_7 = arith.constant dense<0.000000e+00> : vector<8xf32>
    %10 = vector.multi_reduction <add>, %9, %cst_7 [0] : vector<4x8xf32> to vector<8xf32>
    %11 = vector.shape_cast %10 : vector<8xf32> to vector<1x8xf32>
    %12 = arith.addf %11, %7 : vector<1x8xf32>
    %cst_8 = arith.constant 0.000000e+00 : f32
    %13 = vector.broadcast %cst_8 : f32 to vector<1x8xf32>
    %14 = arith.maximumf %12, %13 : vector<1x8xf32>
    %c0_9 = arith.constant 0 : index
    %c0_10 = arith.constant 0 : index
    %15 = vector.load %arg4[%c0_9, %c0_10] : memref<4x8xf32, #tpu.memory_space<vmem>>, vector<4x8xf32>
    %c0_11 = arith.constant 0 : index
    %c0_12 = arith.constant 0 : index
    %16 = vector.load %arg5[%c0_11, %c0_12] : memref<4x1xf32, #tpu.memory_space<vmem>>, vector<4x1xf32>
    %17 = vector.broadcast %14 : vector<1x8xf32> to vector<4x8xf32>
    %18 = arith.mulf %15, %17 : vector<4x8xf32>
    %cst_13 = arith.constant dense<0.000000e+00> : vector<4xf32>
    %19 = vector.multi_reduction <add>, %18, %cst_13 [1] : vector<4x8xf32> to vector<4xf32>
    %20 = vector.shape_cast %19 : vector<4xf32> to vector<4x1xf32>
    %21 = arith.addf %20, %16 : vector<4x1xf32>
    %cst_14 = arith.constant 0.000000e+00 : f32
    %22 = vector.broadcast %cst_14 : f32 to vector<4x1xf32>
    %23 = arith.subf %22, %21 : vector<4x1xf32>
    %24 = math.exp %23 : vector<4x1xf32>
    %cst_15 = arith.constant 1.000000e+00 : f32
    %25 = vector.broadcast %cst_15 : f32 to vector<4x1xf32>
    %26 = arith.addf %25, %24 : vector<4x1xf32>
    %cst_16 = arith.constant 1.000000e+00 : f32
    %27 = vector.broadcast %cst_16 : f32 to vector<4x1xf32>
    %28 = arith.divf %27, %26 : vector<4x1xf32>
    %29 = vector.broadcast %28 : vector<4x1xf32> to vector<4x256xf32>
    %30 = arith.mulf %1, %29 : vector<4x256xf32>
    %c0_17 = arith.constant 0 : index
    %c0_18 = arith.constant 0 : index
    %c0_19 = arith.constant 0 : index
    %31 = vector.load %arg6[%c0_17, %c0_18, %c0_19] : memref<1x4x256xf32, #tpu.memory_space<vmem>>, vector<1x4x256xf32>
    %32 = vector.shape_cast %31 : vector<1x4x256xf32> to vector<4x256xf32>
    %33 = vector.shape_cast %30 : vector<4x256xf32> to vector<1x4x256xf32>
    tpu.vector_store %arg6[%c0_17, %c0_18, %c0_19], %33 {strides = array<i32>} : memref<1x4x256xf32, #tpu.memory_space<vmem>>, vector<1x4x256xf32>,
    return
  }
  func.func @transform_0(%arg0: i32) -> (i32, i32, i32) {
    %c0_i32 = arith.constant 0 : i32
    %c0_i32_0 = arith.constant 0 : i32
    %c0_i32_1 = arith.constant 0 : i32
    return %arg0, %c0_i32, %c0_i32_0 : i32, i32, i32
  }
  func.func @transform_1(%arg0: i32) -> (i32, i32) {
    %c0_i32 = arith.constant 0 : i32
    %c0_i32_0 = arith.constant 0 : i32
    %c0_i32_1 = arith.constant 0 : i32
    return %c0_i32, %c0_i32_0 : i32, i32
  }
  func.func @transform_2(%arg0: i32) -> (i32, i32) {
    %c0_i32 = arith.constant 0 : i32
    %c0_i32_0 = arith.constant 0 : i32
    %c0_i32_1 = arith.constant 0 : i32
    return %c0_i32, %c0_i32_0 : i32, i32
  }
  func.func @transform_3(%arg0: i32) -> (i32, i32) {
    %c0_i32 = arith.constant 0 : i32
    %c0_i32_0 = arith.constant 0 : i32
    %c0_i32_1 = arith.constant 0 : i32
    return %c0_i32, %c0_i32_0 : i32, i32
  }
  func.func @transform_4(%arg0: i32) -> (i32, i32) {
    %c0_i32 = arith.constant 0 : i32
    %c0_i32_0 = arith.constant 0 : i32
    %c0_i32_1 = arith.constant 0 : i32
    return %c0_i32, %c0_i32_0 : i32, i32
  }
  func.func @transform_5(%arg0: i32) -> (i32, i32, i32) {
    %c0_i32 = arith.constant 0 : i32
    %c0_i32_0 = arith.constant 0 : i32
    %c0_i32_1 = arith.constant 0 : i32
    return %arg0, %c0_i32, %c0_i32_0 : i32, i32, i32
  }
}

</mosaic_0001>

<llo_original>
// kernel: tpu_custom_call.1
$region0: #{tpu_custom_call.1}
  #allocation0 [shape = 'u32[]', space=smem, size = 0x4, offset = 0x4, fixed_abs, tag = 'smem constant byte address 0x4 - core index']
  #allocation1 [shape = 'u32[144,128]{1,0:T(1,128)}', space=vmem, size = 0x12000, scoped, tag = 'internal scratch']
  %s0 = inlined_call_operand.hbm [shape: f32[2,4,256], index: 0, kind: input, shape index: {}]
  %s1 = inlined_call_operand.vmem [shape: f32[4,8], index: 1, kind: input, shape index: {}]
  %s2 = inlined_call_operand.hbm [shape: f32[1,8], index: 2, kind: input, shape index: {}]
  %s3 = inlined_call_operand.vmem [shape: f32[4,8], index: 3, kind: input, shape index: {}]
  %s4 = inlined_call_operand.vmem [shape: f32[4,1], index: 4, kind: input, shape index: {}]
  %s5 = inlined_call_operand.hbm [shape: f32[2,4,256], index: 5, kind: output, shape index: {}]
  %s6 = sld [smem:[#allocation0]]
  $region61: #{tpu_custom_call.1} parent=0
    _
  %s8 = ssub.s32 1, %s6
  %s9 = scalar_select 0, %s8, %s6
  $region1: #{tpu_custom_call.1} parent=0
    #allocation2 [shape = 'u8[8192]{0}', space=vmem, size = 0x2000, scoped, tag = 'input window, operand 0']
    #allocation3 [shape = 's32[2]{0}', space=sflag, size = 0x8, scoped, tag = 'scoped memory for tpu_custom_call.1']
    #allocation4 [shape = 's32[2]{0}', space=sflag, size = 0x8, scoped, tag = 'scoped memory for tpu_custom_call.1']
    #allocation5 [shape = 'u8[512]{0}', space=vmem, size = 0x400, scoped, tag = 'input window, operand 2, single buffered']
    #allocation6 [shape = 's32[1]{0}', space=sflag, size = 0x4, scoped, tag = 'scoped memory for tpu_custom_call.1']
    #allocation7 [shape = 'u8[8192]{0}', space=vmem, size = 0x2000, scoped, tag = 'output window, operand 0']
    %10 = vsyncpa [#allocation3], 0
    %s11 = scalar_lea.sflag [#allocation3], 1
    %12 = vsyncpa %s11, 0
    %13 = vsyncpa [#allocation6], 0
    %14 = vsyncpa [#allocation4], 0
    %s15 = scalar_lea.sflag [#allocation4], 1
    %16 = vsyncpa %s15, 0
    loop: start=0, step=1, limit=4
    $region2: #{tpu_custom_call.1} parent=1 // loop_pre_header
      _
    $region3: #{tpu_custom_call.1} parent=1 // loop_header
      %s18 = sphi 0, %s22
      %p19 = scmp.ge.s32.totalorder %s18, 4
      %s28 = sphi 0, %s30
      %s31 = sphi 0, %s28
      %s32 = sphi 0, %s31
      %s48 = sphi 0, %s32
      %s52 = sphi 0, %s52
      %s54 = sphi 0, %s52
      %s55 = sphi 0, %s54
      %s69 = sphi 0, %s55
      %s73 = sphi 0, %s73
      %s75 = sphi 0, %s73
      %s76 = sphi 0, %s75
      %s90 = sphi 0, %s76
      %s94 = sphi 0, %s94
      %s96 = sphi 0, %s94
      %s97 = sphi 0, %s96
      %s111 = sphi 0, %s97
      %s115 = sphi 0, %s115
      %s117 = sphi 0, %s115
      %s118 = sphi 0, %s117
      %s132 = sphi 0, %s118
      %s138 = sphi 0, %s140
      %s141 = sphi 0, %s138
      %s142 = sphi 0, %s141
      %s158 = sphi 0, %s142
    $region4: #{tpu_custom_call.1} parent=1 // loop_header_branch
      %21 = sbr.rel (%p19) target = $region8
    $region5: #{tpu_custom_call.1} parent=1 // loop_body
      %s23 = ssub.s32 %s18, 1
      %s24 = ssub.s32 %s18, 2
      %s25 = sadd.s32 %s18, 1
      %s26 = ssub.s32 %s18, %s25
      %p27 = scmp.eq.s32.totalorder %s26, 0
      %s29 = sadd.s32 %s28, 1
      %s30 = scalar_select %p27, %s28, %s29
      %p33 = pneg %p27
      %p34 = scmp.eq.s32.totalorder %s18, 1
      %p35 = por %p33, %p34
      %p36 = scmp.ne.s32.totalorder %s28, %s31
      %p37 = scmp.eq.s32.totalorder %s18, 0
      %p38 = por %p36, %p37
      %p39 = scmp.ne.s32.totalorder %s28, %s31
      %p40 = scmp.eq.s32.totalorder %s23, 1
      %p41 = por %p39, %p40
      %p42 = scmp.ne.s32.totalorder %s31, %s32
      %p43 = scmp.eq.s32.totalorder %s23, 0
      %p44 = por %p42, %p43
      %p45 = scmp.ne.s32.totalorder %s31, %s32
      %p46 = scmp.eq.s32.totalorder %s24, 1
      %p47 = por %p45, %p46
      %p49 = scmp.ne.s32.totalorder %s32, %s48
      %p50 = scmp.eq.s32.totalorder %s24, 0
      %p51 = por %p49, %p50
      %s53 = sadd.s32 %s52, 1
      %p56 = scmp.eq.s32.totalorder %s18, 1
      %p57 = scmp.ne.s32.totalorder %s52, %s54
      %p58 = scmp.eq.s32.totalorder %s18, 0
      %p59 = por %p57, %p58
      %p60 = scmp.ne.s32.totalorder %s52, %s54
      %p61 = scmp.eq.s32.totalorder %s23, 1
      %p62 = por %p60, %p61
      %p63 = scmp.ne.s32.totalorder %s54, %s55
      %p64 = scmp.eq.s32.totalorder %s23, 0
      %p65 = por %p63, %p64
      %p66 = scmp.ne.s32.totalorder %s54, %s55
      %p67 = scmp.eq.s32.totalorder %s24, 1
      %p68 = por %p66, %p67
      %p70 = scmp.ne.s32.totalorder %s55, %s69
      %p71 = scmp.eq.s32.totalorder %s24, 0
      %p72 = por %p70, %p71
      %s74 = sadd.s32 %s73, 1
      %p77 = scmp.eq.s32.totalorder %s18, 1
      %p78 = scmp.ne.s32.totalorder %s73, %s75
      %p79 = scmp.eq.s32.totalorder %s18, 0
      %p80 = por %p78, %p79
      %p81 = scmp.ne.s32.totalorder %s73, %s75
      %p82 = scmp.eq.s32.totalorder %s23, 1
      %p83 = por %p81, %p82
      %p84 = scmp.ne.s32.totalorder %s75, %s76
      %p85 = scmp.eq.s32.totalorder %s23, 0
      %p86 = por %p84, %p85
      %p87 = scmp.ne.s32.totalorder %s75, %s76
      %p88 = scmp.eq.s32.totalorder %s24, 1
      %p89 = por %p87, %p88
      %p91 = scmp.ne.s32.totalorder %s76, %s90
      %p92 = scmp.eq.s32.totalorder %s24, 0
      %p93 = por %p91, %p92
      %s95 = sadd.s32 %s94, 1
      %p98 = scmp.eq.s32.totalorder %s18, 1
      %p99 = scmp.ne.s32.totalorder %s94, %s96
      %p100 = scmp.eq.s32.totalorder %s18, 0
      %p101 = por %p99, %p100
      %p102 = scmp.ne.s32.totalorder %s94, %s96
      %p103 = scmp.eq.s32.totalorder %s23, 1
      %p104 = por %p102, %p103
      %p105 = scmp.ne.s32.totalorder %s96, %s97
      %p106 = scmp.eq.s32.totalorder %s23, 0
      %p107 = por %p105, %p106
      %p108 = scmp.ne.s32.totalorder %s96, %s97
      %p109 = scmp.eq.s32.totalorder %s24, 1
      %p110 = por %p108, %p109
      %p112 = scmp.ne.s32.totalorder %s97, %s111
      %p113 = scmp.eq.s32.totalorder %s24, 0
      %p114 = por %p112, %p113
      %s116 = sadd.s32 %s115, 1
      %p119 = scmp.eq.s32.totalorder %s18, 1
      %p120 = scmp.ne.s32.totalorder %s115, %s117
      %p121 = scmp.eq.s32.totalorder %s18, 0
      %p122 = por %p120, %p121
      %p123 = scmp.ne.s32.totalorder %s115, %s117
      %p124 = scmp.eq.s32.totalorder %s23, 1
      %p125 = por %p123, %p124
      %p126 = scmp.ne.s32.totalorder %s117, %s118
      %p127 = scmp.eq.s32.totalorder %s23, 0
      %p128 = por %p126, %p127
      %p129 = scmp.ne.s32.totalorder %s117, %s118
      %p130 = scmp.eq.s32.totalorder %s24, 1
      %p131 = por %p129, %p130
      %p133 = scmp.ne.s32.totalorder %s118, %s132
      %p134 = scmp.eq.s32.totalorder %s24, 0
      %p135 = por %p133, %p134
      %s136 = ssub.s32 %s18, %s25
      %p137 = scmp.eq.s32.totalorder %s136, 0
      %s139 = sadd.s32 %s138, 1
      %s140 = scalar_select %p137, %s138, %s139
      %p143 = pneg %p137
      %p144 = scmp.eq.s32.totalorder %s18, 1
      %p145 = por %p143, %p144
      %p146 = scmp.ne.s32.totalorder %s138, %s141
      %p147 = scmp.eq.s32.totalorder %s18, 0
      %p148 = por %p146, %p147
      %p149 = scmp.ne.s32.totalorder %s138, %s141
      %p150 = scmp.eq.s32.totalorder %s23, 1
      %p151 = por %p149, %p150
      %p152 = scmp.ne.s32.totalorder %s141, %s142
      %p153 = scmp.eq.s32.totalorder %s23, 0
      %p154 = por %p152, %p153
      %p155 = scmp.ne.s32.totalorder %s141, %s142
      %p156 = scmp.eq.s32.totalorder %s24, 1
      %p157 = por %p155, %p156
      %p159 = scmp.ne.s32.totalorder %s142, %s158
      %p160 = scmp.eq.s32.totalorder %s24, 0
      %p161 = por %p159, %p160
      %p162 = scmp.le.s32.totalorder 1, %s18
      %p163 = scmp.lt.s32.totalorder %s18, 3
      %p164 = pnand %p162, %p163
      %p165 = pneg %p164
      // Predicated region
      $region9: #{tpu_custom_call.1} parent=5 // pred_check
        _
      $region10: #{tpu_custom_call.1} parent=5 // pred_check_branch
        %167 = sbr.rel (%p164) target = $region12
      $region11: #{tpu_custom_call.1} parent=5 // pred_region
        %s168 = ssub.s32 %s18, 1
        // Predicated region
        $region13: #{tpu_custom_call.1} parent=11 // pred_check
          %p169 = pneg %p65
        $region14: #{tpu_custom_call.1} parent=11 // pred_check_branch
          %171 = sbr.rel (%p169) target = $region16
        $region15: #{tpu_custom_call.1} parent=11 // pred_region
          _
        $region16: #{tpu_custom_call.1} parent=11 // pred_fallthru
          _
        // Predicated region
        $region17: #{tpu_custom_call.1} parent=11 // pred_check
          %p172 = pneg %p86
        $region18: #{tpu_custom_call.1} parent=11 // pred_check_branch
          %174 = sbr.rel (%p172) target = $region20
        $region19: #{tpu_custom_call.1} parent=11 // pred_region
          %s176 = ssub.s32 16, 16
          %177 = vsyncadd [#allocation6], %s176
          %s179 = sshll.u32 [#allocation5], 4
          %s180 = int_to_ptr.vmem [resolvable:$true] %s179
          %182 = dma.hbm_to_vmem [thread:$0]  %s2, 16, %s180, [#allocation6]
        $region20: #{tpu_custom_call.1} parent=11 // pred_fallthru
          _
        // Predicated region
        $region21: #{tpu_custom_call.1} parent=11 // pred_check
          %p183 = pneg %p107
        $region22: #{tpu_custom_call.1} parent=11 // pred_check_branch
          %185 = sbr.rel (%p183) target = $region24
        $region23: #{tpu_custom_call.1} parent=11 // pred_region
          _
        $region24: #{tpu_custom_call.1} parent=11 // pred_fallthru
          _
        // Predicated region
        $region25: #{tpu_custom_call.1} parent=11 // pred_check
          %p186 = pneg %p128
        $region26: #{tpu_custom_call.1} parent=11 // pred_check_branch
          %188 = sbr.rel (%p186) target = $region28
        $region27: #{tpu_custom_call.1} parent=11 // pred_region
          _
        $region28: #{tpu_custom_call.1} parent=11 // pred_fallthru
          _
      $region12: #{tpu_custom_call.1} parent=5 // pred_fallthru
        _
      %p189 = scmp.lt.s32.totalorder %s18, 2
      // Predicated region
      $region29: #{tpu_custom_call.1} parent=5 // pred_check
        %p190 = pneg %p189
      $region30: #{tpu_custom_call.1} parent=5 // pred_check_branch
        %192 = sbr.rel (%p190) target = $region32
      $region31: #{tpu_custom_call.1} parent=5 // pred_region
        // Predicated region
        $region33: #{tpu_custom_call.1} parent=31 // pred_check
          %p193 = pneg %p38
        $region34: #{tpu_custom_call.1} parent=31 // pred_check_branch
          %195 = sbr.rel (%p193) target = $region36
        $region35: #{tpu_custom_call.1} parent=31 // pred_region
          %s196 = sand.u32 %s28, 1
          %s197 = scalar_lea.sflag [#allocation3], %s196
          %s198 = sand.u32 %s28, 1
          %s199 = smul.addr %s198, 8
          %s200 = scalar_lea.vmem [#allocation2], %s199
          %s202 = ssub.s32 128, 128
          %203 = vsyncadd %s197, %s202
          %s204 = smul.addr %s18, 2
          %s205 = smul.addr %s204, 64
          %s206 = scalar_lea.hbm %s0, %s205
          %s208 = sshll.u32 %s200, 4
          %s209 = int_to_ptr.vmem [resolvable:$true] %s208
          %211 = dma.hbm_to_vmem [thread:$0]  %s206, 128, %s209, %s197
        $region36: #{tpu_custom_call.1} parent=31 // pred_fallthru
          _
      $region32: #{tpu_custom_call.1} parent=5 // pred_fallthru
        _
      %p212 = scmp.le.s32.totalorder 1, %s18
      %p213 = scmp.lt.s32.totalorder %s18, 3
      %p214 = pnand %p212, %p213
      %p215 = pneg %p214
      // Predicated region
      $region37: #{tpu_custom_call.1} parent=5 // pred_check
        _
      $region38: #{tpu_custom_call.1} parent=5 // pred_check_branch
        %217 = sbr.rel (%p214) target = $region40
      $region39: #{tpu_custom_call.1} parent=5 // pred_region
        %s218 = ssub.s32 %s18, 1
        %s219 = sand.u32 %s31, 1
        %s220 = scalar_lea.sflag [#allocation3], %s219
        %s221 = sand.u32 %s31, 1
        %s222 = smul.addr %s221, 8
        %s223 = scalar_lea.vmem [#allocation2], %s222
        // Predicated region
        $region41: #{tpu_custom_call.1} parent=39 // pred_check
          %p224 = pneg %p44
        $region42: #{tpu_custom_call.1} parent=39 // pred_check_branch
          %226 = sbr.rel (%p224) target = $region44
        $region43: #{tpu_custom_call.1} parent=39 // pred_region
          %227 = dma.done %s220, 128
        $region44: #{tpu_custom_call.1} parent=39 // pred_fallthru
          _
        // Predicated region
        $region45: #{tpu_custom_call.1} parent=39 // pred_check
          %p228 = pneg %p86
        $region46: #{tpu_custom_call.1} parent=39 // pred_check_branch
          %230 = sbr.rel (%p228) target = $region48
        $region47: #{tpu_custom_call.1} parent=39 // pred_region
          %231 = dma.done [#allocation6], 16
        $region48: #{tpu_custom_call.1} parent=39 // pred_fallthru
          _
        %s232 = sand.u32 %s31, 1
        %s233 = scalar_lea.sflag [#allocation3], %s232
        %s234 = sand.u32 %s31, 1
        %s235 = smul.addr %s234, 8
        %s236 = scalar_lea.vmem [#allocation2], %s235
        %p237 = pneg %p44
        %p238 = pneg %p41
        %p239 = pneg %p65
        %p240 = pneg %p62
        %p241 = pneg %p86
        %p242 = pneg %p83
        %p243 = pneg %p107
        %p244 = pneg %p104
        %p245 = pneg %p128
        %p246 = pneg %p125
        %p247 = pneg %p154
        %p248 = pneg %p151
        %s249 = sand.u32 %s141, 1
        %s250 = scalar_lea.sflag [#allocation4], %s249
        %s251 = sand.u32 %s141, 1
        %s252 = smul.addr %s251, 8
        %s253 = scalar_lea.vmem [#allocation7], %s252
        %v254 = vld [vmem:[%s223] sm:$0xff]
        %v256 = vcombine.high %v254, %v254
        %vm258 = vcmask 1043456
        %v259 = vsel %vm258, %v254, 0.0
        %v260 = vsel %vm258, %v256, 0.0
        %v261 = vadd.f32 %v259, %v260
        %262 = vadd.xlane.f32.xlu0 %v261
        %v263 = vpop.xlane.xlu0 %262
        %v264 = vrcp.pop 256.0
        %v265 = vmul.f32 %v263, %v264
        %v266 = vld [vmem:[%s1] sm:$0xf]
        %v267 = vld [vmem:[#allocation5] sm:$0x1]
        %v268 = vmul.f32 %v266, %v265
        %vm269 = vcmask 60416
        %v270 = vsel %vm269, %v268, 0.0
        %v271 = vrot.slane %v270, 4
        %v272 = vadd.f32 %v270, %v271
        %v273 = vrot.slane %v272, 2
        %v274 = vadd.f32 %v272, %v273
        %v275 = vrot.slane %v274, 1
        %v276 = vadd.f32 %v274, %v275
        %v277 = vadd.f32 %v276, %v267
        %v278 = vmax.f32 %v277, 0.0
        %v279 = vld [vmem:[%s3] sm:$0xf]
        %v280 = vld [vmem:[%s4] sm:$0xf]
        %v281 = vlaneseq
        %v282 = vshrl.u32 %v281, 7
        %v283 = vsub.s32 0, %v282
        %v284 = vrot.slane %v278, %v283
        %v285 = vmul.f32 %v279, %v284
        %v286 = vsel %vm269, %v285, 0.0
        %287 = vadd.xlane.f32.xlu0 %v286
        %v288 = vpop.xlane.xlu0 %287
        %v289 = vadd.f32 %v288, %v280
        %v290 = vsub.f32 0.0, %v289
        %v291 = vmul.f32 %v290, 1.442695
        %v292 = vpow.pop %v291
        %v293 = vadd.f32 %v292, 1.0
        %v294 = vrcp.pop %v293
        %v295 = vmul.f32 1.0, %v294
        %297 = vset.pattern.permute.xlu0 0
        %298 = vperm.xlu0 %297, %v295
        %v299 = vpop.permute.xlu0 %298
        %v301 = vunpack.c.l.s4 839922192
        %v302 = vunpack.c.0.s8 %v301
        %v303 = vlaneseq
        %v304 = vshrl.u32 %v303, 7
        %v305 = vsub.s32 %v302, %v304
        %v306 = vrot.slane %v299, %v305
        %v308 = vmul.f32 %v254, %v306
        %309 = vst [vmem:[%s253] sm:$0xff] %v308
        %s310 = sand.u32 %s141, 1
        %s311 = scalar_lea.sflag [#allocation4], %s310
        %s312 = sand.u32 %s141, 1
        %s313 = smul.addr %s312, 8
        %s314 = scalar_lea.vmem [#allocation7], %s313
        // Predicated region
        $region49: #{tpu_custom_call.1} parent=39 // pred_check
          %p315 = pneg %p151
        $region50: #{tpu_custom_call.1} parent=39 // pred_check_branch
          %317 = sbr.rel (%p315) target = $region52
        $region51: #{tpu_custom_call.1} parent=39 // pred_region
          %s319 = ssub.s32 128, 128
          %320 = vsyncadd %s311, %s319
          %s321 = smul.addr %s23, 2
          %s322 = smul.addr %s321, 64
          %s323 = scalar_lea.hbm %s5, %s322
          %s325 = sshll.u32 %s314, 4
          %s326 = int_to_ptr.vmem [resolvable:$true] %s325
          %328 = dma.vmem_to_hbm [thread:$0]  %s326, 128, %s323, %s311
        $region52: #{tpu_custom_call.1} parent=39 // pred_fallthru
          _
      $region40: #{tpu_custom_call.1} parent=5 // pred_fallthru
        _
      %p329 = scmp.le.s32.totalorder 2, %s18
      // Predicated region
      $region53: #{tpu_custom_call.1} parent=5 // pred_check
        %p330 = pneg %p329
      $region54: #{tpu_custom_call.1} parent=5 // pred_check_branch
        %332 = sbr.rel (%p330) target = $region56
      $region55: #{tpu_custom_call.1} parent=5 // pred_region
        %s333 = ssub.s32 %s18, 2
        // Predicated region
        $region57: #{tpu_custom_call.1} parent=55 // pred_check
          %p334 = pneg %p157
        $region58: #{tpu_custom_call.1} parent=55 // pred_check_branch
          %336 = sbr.rel (%p334) target = $region60
        $region59: #{tpu_custom_call.1} parent=55 // pred_region
          %s337 = sand.u32 %s142, 1
          %s338 = scalar_lea.sflag [#allocation4], %s337
          %s339 = sand.u32 %s142, 1
          %s340 = smul.addr %s339, 8
          %s341 = scalar_lea.vmem [#allocation7], %s340
          %342 = dma.done %s338, 128
        $region60: #{tpu_custom_call.1} parent=55 // pred_fallthru
          _
      $region56: #{tpu_custom_call.1} parent=5 // pred_fallthru
        _
    $region6: #{tpu_custom_call.1} parent=1 // loop_footer
      %s22 = sadd.s32 1, %s18
    $region7: #{tpu_custom_call.1} parent=1 // loop_footer_branch
      %17 = sbr.rel target = $region3
    $region8: #{tpu_custom_call.1} parent=1 // loop_exit
      _
    %343 = vsyncpa [#allocation3], 1
    %s344 = scalar_lea.sflag [#allocation3], 1
    %345 = vsyncpa %s344, 1
    %346 = vsyncpa [#allocation6], 1
    %347 = vsyncpa [#allocation4], 1
    %s348 = scalar_lea.sflag [#allocation4], 1
    %349 = vsyncpa %s348, 1

</llo_original>
